<compile_context>
chip_gen: v7x
topology: tpu7x:2x2x1
jax: 0.10.0
libtpu: 0.0.40
codegen_flags: <defaults>
</compile_context>

<pallas_src>
import functools

import jax
import jax.numpy as jnp
from jax.experimental import pallas as pl
from jax.experimental.pallas import tpu as pltpu

LN_EPS = 1e-5


def _round_up(n, m):
    return (n + m - 1) // m * m


def _sgu_kernel(u_ref, v_ref, w_ref, b_ref, gamma_ref, beta_ref, o_ref,
                vnorm_ref, *, hidden, matmul_dtype):
    # u_ref : (1, TM, Hp)  x.dtype      -- gate half, current output-token tile
    # v_ref : (1, Tp, Hp)  x.dtype      -- full token extent (j-invariant block)
    # w_ref : (TM, Tp)     matmul dtype -- rows of the token-mixing matrix
    # b_ref : (TM, 1)      f32          -- conv bias rows for this tile
    # gamma_ref / beta_ref : (1, Hp) f32
    # o_ref : (1, TM, Hp)  x.dtype
    # vnorm_ref : (Tp, Hp) matmul dtype -- LayerNormed v, persists across token tiles
    j = pl.program_id(1)

    @pl.when(j == 0)
    def _():
        v = v_ref[0].astype(jnp.float32)                      # (Tp, Hp)
        # One-pass statistics: the two cross-lane reductions are independent.
        s1 = jnp.sum(v, axis=-1, keepdims=True)
        s2 = jnp.sum(v * v, axis=-1, keepdims=True)
        inv_h = 1.0 / hidden                                  # true (unpadded) H
        mean = s1 * inv_h
        var = jnp.maximum(s2 * inv_h - mean * mean, 0.0)
        inv = jax.lax.rsqrt(var + LN_EPS)
        vn = (v - mean) * inv * gamma_ref[...] + beta_ref[...]
        vnorm_ref[...] = vn.astype(matmul_dtype)

    # Token mixing for this tile of output tokens (MXU, f32 accumulation).
    vm = jnp.dot(w_ref[...], vnorm_ref[...],
                 preferred_element_type=jnp.float32)          # (TM, Hp) f32
    vm = vm + b_ref[...]
    # Gate: multiply in the native dtype -- no f32 copy of u is ever made.
    o_ref[0] = u_ref[0] * vm.astype(o_ref.dtype)


def spatial_gating_unit(x, w, b, gamma, beta):
    """x: (B, T, 2H). w: (T, T). b: (T,). gamma/beta: (H,). Returns (B, T, H)."""
    B, T, D2 = x.shape
    H = D2 // 2

    Tp = _round_up(T, 8)
    Hp = _round_up(H, 128)
    needs_pad = (Tp != T) or (Hp != H)

    # bf16 inputs -> bf16 MXU matmul (f32 accumulation); otherwise stay f32.
    matmul_dtype = jnp.bfloat16 if x.dtype == jnp.bfloat16 else jnp.float32

    # Output-token tile: largest tile dividing Tp (Tp is a multiple of 8).
    TM = next(t for t in (512, 256, 128, 64, 32, 16, 8) if Tp % t == 0)
    n_tok = Tp // TM

    # Resident parameter blocks: pre-cast & pre-padded once in the wrapper so the
    # kernel never re-casts them per grid step.
    w_p = jnp.zeros((Tp, Tp), matmul_dtype).at[:T, :T].set(w.astype(matmul_dtype))
    b_p = jnp.zeros((Tp, 1), jnp.float32).at[:T, 0].set(b.astype(jnp.float32))
    gamma_p = jnp.zeros((1, Hp), jnp.float32).at[0, :H].set(gamma.astype(jnp.float32))
    beta_p = jnp.zeros((1, Hp), jnp.float32).at[0, :H].set(beta.astype(jnp.float32))

    if needs_pad:
        # Split + zero-pad u/v once on the host; the kernel sees aligned tiles.
        u_in = jnp.pad(x[..., :H], ((0, 0), (0, Tp - T), (0, Hp - H)))
        v_in = jnp.pad(x[..., H:], ((0, 0), (0, Tp - T), (0, Hp - H)))
        u_spec = pl.BlockSpec((1, TM, Hp), lambda i, j: (i, j, 0))
        v_spec = pl.BlockSpec((1, Tp, Hp), lambda i, j: (i, 0, 0))
    else:
        # Already aligned: pass x twice; the BlockSpecs split the two halves so
        # no lane slicing (and no extra HBM copy) is ever performed.
        u_in = x
        v_in = x
        u_spec = pl.BlockSpec((1, TM, Hp), lambda i, j: (i, j, 0))
        v_spec = pl.BlockSpec((1, Tp, Hp), lambda i, j: (i, 0, 1))

    # Explicit VMEM budget (matters on v7x's 64 MiB / 32 MiB scoped default).
    itemsize = x.dtype.itemsize
    m_itemsize = jnp.dtype(matmul_dtype).itemsize
    vmem_est = (2 * (TM * Hp + Tp * Hp + TM * Hp) * itemsize   # u, v, out (double-buffered)
                + 2 * TM * Tp * m_itemsize                     # w tile
                + Tp * Hp * m_itemsize                         # vnorm scratch
                + 4 * Tp * Hp)                                 # f32 LN temporaries
    vmem_limit = int(min(100 * 2**20, max(32 * 2**20, 2 * vmem_est)))

    kernel = functools.partial(_sgu_kernel, hidden=float(H),
                               matmul_dtype=matmul_dtype)

    out = pl.pallas_call(
        kernel,
        out_shape=jax.ShapeDtypeStruct((B, Tp, Hp), x.dtype),
        grid_spec=pltpu.PrefetchScalarGridSpec(
            num_scalar_prefetch=0,
            grid=(B, n_tok),
            in_specs=[
                u_spec,
                v_spec,
                pl.BlockSpec((TM, Tp), lambda i, j: (j, 0)),
                pl.BlockSpec((TM, 1), lambda i, j: (j, 0)),
                pl.BlockSpec((1, Hp), lambda i, j: (0, 0)),
                pl.BlockSpec((1, Hp), lambda i, j: (0, 0)),
            ],
            out_specs=pl.BlockSpec((1, TM, Hp), lambda i, j: (i, j, 0)),
            scratch_shapes=[pltpu.VMEM((Tp, Hp), matmul_dtype)],
        ),
        compiler_params=pltpu.CompilerParams(
            dimension_semantics=("parallel", "arbitrary"),
            vmem_limit_bytes=vmem_limit,
        ),
    )(u_in, v_in, w_p, b_p, gamma_p, beta_p)

    if needs_pad:
        out = out[:, :T, :H]
    return out


def _reference(x, w, b, gamma, beta):
    H = x.shape[-1] // 2
    u, v = x[..., :H], x[..., H:]
    mean = jnp.mean(v, axis=-1, keepdims=True)
    var = jnp.mean((v - mean) ** 2, axis=-1, keepdims=True)
    v = (v - mean) / jnp.sqrt(var + LN_EPS) * gamma + beta
    v = jnp.einsum("ij,bjd->bid", w, v) + b[None, :, None]
    return u * v


if __name__ == "__main__":
    key = jax.random.PRNGKey(0)

    def run_case(B, T, H, k):
        kx, kw = jax.random.split(k)
        x = jax.random.normal(kx, (B, T, 2 * H), dtype=jnp.float32)
        # Conv1d(tokens, tokens, k=1): weight (T, T); bias init to 1.0 as in module.
        w = jax.random.normal(kw, (T, T), dtype=jnp.float32) * (1.0 / jnp.sqrt(T))
        b = jnp.ones((T,), dtype=jnp.float32)
        # LayerNorm affine params (PyTorch default init: ones / zeros).
        gamma = jnp.ones((H,), dtype=jnp.float32)
        beta = jnp.zeros((H,), dtype=jnp.float32)

        out = jax.block_until_ready(spatial_gating_unit(x, w, b, gamma, beta))
        ref = _reference(x, w, b, gamma, beta)
        assert out.shape == (B, T, H)
        assert jnp.allclose(out, ref, atol=1e-4, rtol=1e-5), "mismatch vs reference"

    k1, k2 = jax.random.split(key)
    run_case(2, 8, 32, k1)    # padded path (H -> 128 lanes, host-side split)
    run_case(2, 8, 128, k2)   # aligned path (x passed twice, BlockSpec split)
    print("KERNEL_OK")
</pallas_src>

<mosaic_0001>
module attributes {stable_mosaic.version = 11 : i64} {
  func.func @_sgu_kernel(%arg0: i32, %arg1: i32, %arg2: memref<1x8x128xf32, #tpu.memory_space<vmem>>, %arg3: memref<1x8x128xf32, #tpu.memory_space<vmem>>, %arg4: memref<8x8xf32, #tpu.memory_space<vmem>>, %arg5: memref<8x1xf32, #tpu.memory_space<vmem>>, %arg6: memref<1x128xf32, #tpu.memory_space<vmem>>, %arg7: memref<1x128xf32, #tpu.memory_space<vmem>>, %arg8: memref<1x8x128xf32, #tpu.memory_space<vmem>>, %arg9: memref<8x128xf32, #tpu.memory_space<vmem>>) attributes {dimension_semantics = [#tpu.dimension_semantics<parallel>, #tpu.dimension_semantics<arbitrary>], iteration_bounds = array<i64: 2, 1>, scalar_prefetch = 0 : i64, scratch_operands = 1 : i64, tpu.core_type = #tpu.core_type<tc>, window_params = [{transform_indices = @transform_0, window_bounds = array<i64: 1, 8, 128>}, {transform_indices = @transform_1, window_bounds = array<i64: 1, 8, 128>}, {transform_indices = @transform_2, window_bounds = array<i64: 8, 8>}, {transform_indices = @transform_3, window_bounds = array<i64: 8, 1>}, {pipeline_mode = #tpu.pipeline_mode<synchronous>, transform_indices = @transform_4, window_bounds = array<i64: 1, 128>}, {pipeline_mode = #tpu.pipeline_mode<synchronous>, transform_indices = @transform_5, window_bounds = array<i64: 1, 128>}, {transform_indices = @transform_6, window_bounds = array<i64: 1, 8, 128>}]} {
    %c0_i32 = arith.constant 0 : i32
    %0 = arith.cmpi eq, %arg1, %c0_i32 : i32
    %1 = arith.extui %0 : i1 to i32
    %c0_i32_0 = arith.constant 0 : i32
    %2 = arith.cmpi ne, %1, %c0_i32_0 : i32
    scf.if %2 {
      %c0_12 = arith.constant 0 : index
      %c0_13 = arith.constant 0 : index
      %c0_14 = arith.constant 0 : index
      %15 = vector.load %arg3[%c0_12, %c0_13, %c0_14] : memref<1x8x128xf32, #tpu.memory_space<vmem>>, vector<1x8x128xf32>
      %16 = vector.shape_cast %15 : vector<1x8x128xf32> to vector<8x128xf32>
      %cst_15 = arith.constant dense<0.000000e+00> : vector<8xf32>
      %17 = vector.multi_reduction <add>, %16, %cst_15 [1] : vector<8x128xf32> to vector<8xf32>
      %18 = vector.shape_cast %17 : vector<8xf32> to vector<8x1xf32>
      %19 = arith.mulf %16, %16 : vector<8x128xf32>
      %cst_16 = arith.constant dense<0.000000e+00> : vector<8xf32>
      %20 = vector.multi_reduction <add>, %19, %cst_16 [1] : vector<8x128xf32> to vector<8xf32>
      %21 = vector.shape_cast %20 : vector<8xf32> to vector<8x1xf32>
      %cst_17 = arith.constant 3.125000e-02 : f32
      %22 = vector.broadcast %cst_17 : f32 to vector<8x1xf32>
      %23 = arith.mulf %18, %22 : vector<8x1xf32>
      %cst_18 = arith.constant 3.125000e-02 : f32
      %24 = vector.broadcast %cst_18 : f32 to vector<8x1xf32>
      %25 = arith.mulf %21, %24 : vector<8x1xf32>
      %26 = arith.mulf %23, %23 : vector<8x1xf32>
      %27 = arith.subf %25, %26 : vector<8x1xf32>
      %cst_19 = arith.constant 0.000000e+00 : f32
      %28 = vector.broadcast %cst_19 : f32 to vector<8x1xf32>
      %29 = arith.maximumf %27, %28 : vector<8x1xf32>
      %cst_20 = arith.constant 9.99999974E-6 : f32
      %30 = vector.broadcast %cst_20 : f32 to vector<8x1xf32>
      %31 = arith.addf %29, %30 : vector<8x1xf32>
      %32 = math.rsqrt %31 : vector<8x1xf32>
      %33 = vector.broadcast %23 : vector<8x1xf32> to vector<8x128xf32>
      %34 = arith.subf %16, %33 : vector<8x128xf32>
      %35 = vector.broadcast %32 : vector<8x1xf32> to vector<8x128xf32>
      %36 = arith.mulf %34, %35 : vector<8x128xf32>
      %c0_21 = arith.constant 0 : index
      %c0_22 = arith.constant 0 : index
      %37 = vector.load %arg6[%c0_21, %c0_22] : memref<1x128xf32, #tpu.memory_space<vmem>>, vector<1x128xf32>
      %38 = vector.broadcast %37 : vector<1x128xf32> to vector<8x128xf32>
      %39 = arith.mulf %36, %38 : vector<8x128xf32>
      %c0_23 = arith.constant 0 : index
      %c0_24 = arith.constant 0 : index
      %40 = vector.load %arg7[%c0_23, %c0_24] : memref<1x128xf32, #tpu.memory_space<vmem>>, vector<1x128xf32>
      %41 = vector.broadcast %40 : vector<1x128xf32> to vector<8x128xf32>
      %42 = arith.addf %39, %41 : vector<8x128xf32>
      %c0_25 = arith.constant 0 : index
      %c0_26 = arith.constant 0 : index
      %43 = vector.load %arg9[%c0_25, %c0_26] : memref<8x128xf32, #tpu.memory_space<vmem>>, vector<8x128xf32>
      tpu.vector_store %arg9[%c0_25, %c0_26], %42 {strides = array<i32>} : memref<8x128xf32, #tpu.memory_space<vmem>>, vector<8x128xf32>,
    } else {
    }
    %c0 = arith.constant 0 : index
    %c0_1 = arith.constant 0 : index
    %3 = vector.load %arg4[%c0, %c0_1] : memref<8x8xf32, #tpu.memory_space<vmem>>, vector<8x8xf32>
    %c0_2 = arith.constant 0 : index
    %c0_3 = arith.constant 0 : index
    %4 = vector.load %arg9[%c0_2, %c0_3] : memref<8x128xf32, #tpu.memory_space<vmem>>, vector<8x128xf32>
    %cst = arith.constant dense<0.000000e+00> : vector<8x128xf32>
    %5 = tpu.matmul %3, %4, %cst {dimension_numbers = #tpu.dot_dimension_numbers<[1], [0], [0], [1], [0, 0, 1, 1], [], []>} : vector<8x8xf32>, vector<8x128xf32>, vector<8x128xf32> -> vector<8x128xf32>
    %c0_4 = arith.constant 0 : index
    %c0_5 = arith.constant 0 : index
    %6 = vector.load %arg5[%c0_4, %c0_5] : memref<8x1xf32, #tpu.memory_space<vmem>>, vector<8x1xf32>
    %7 = vector.broadcast %6 : vector<8x1xf32> to vector<8x128xf32>
    %8 = arith.addf %5, %7 : vector<8x128xf32>
    %c0_6 = arith.constant 0 : index
    %c0_7 = arith.constant 0 : index
    %c0_8 = arith.constant 0 : index
    %9 = vector.load %arg2[%c0_6, %c0_7, %c0_8] : memref<1x8x128xf32, #tpu.memory_space<vmem>>, vector<1x8x128xf32>
    %10 = vector.shape_cast %9 : vector<1x8x128xf32> to vector<8x128xf32>
    %11 = arith.mulf %10, %8 : vector<8x128xf32>
    %c0_9 = arith.constant 0 : index
    %c0_10 = arith.constant 0 : index
    %c0_11 = arith.constant 0 : index
    %12 = vector.load %arg8[%c0_9, %c0_10, %c0_11] : memref<1x8x128xf32, #tpu.memory_space<vmem>>, vector<1x8x128xf32>
    %13 = vector.shape_cast %12 : vector<1x8x128xf32> to vector<8x128xf32>
    %14 = vector.shape_cast %11 : vector<8x128xf32> to vector<1x8x128xf32>
    tpu.vector_store %arg8[%c0_9, %c0_10, %c0_11], %14 {strides = array<i32>} : memref<1x8x128xf32, #tpu.memory_space<vmem>>, vector<1x8x128xf32>,
    return
  }
  func.func @transform_0(%arg0: i32, %arg1: i32) -> (i32, i32, i32) {
    %c0_i32 = arith.constant 0 : i32
    %c0_i32_0 = arith.constant 0 : i32
    return %arg0, %arg1, %c0_i32 : i32, i32, i32
  }
  func.func @transform_1(%arg0: i32, %arg1: i32) -> (i32, i32, i32) {
    %c0_i32 = arith.constant 0 : i32
    %c0_i32_0 = arith.constant 0 : i32
    %c0_i32_1 = arith.constant 0 : i32
    return %arg0, %c0_i32, %c0_i32_0 : i32, i32, i32
  }
  func.func @transform_2(%arg0: i32, %arg1: i32) -> (i32, i32) {
    %c0_i32 = arith.constant 0 : i32
    %c0_i32_0 = arith.constant 0 : i32
    return %arg1, %c0_i32 : i32, i32
  }
  func.func @transform_3(%arg0: i32, %arg1: i32) -> (i32, i32) {
    %c0_i32 = arith.constant 0 : i32
    %c0_i32_0 = arith.constant 0 : i32
    return %arg1, %c0_i32 : i32, i32
  }
  func.func @transform_4(%arg0: i32, %arg1: i32) -> (i32, i32) {
    %c0_i32 = arith.constant 0 : i32
    %c0_i32_0 = arith.constant 0 : i32
    %c0_i32_1 = arith.constant 0 : i32
    return %c0_i32, %c0_i32_0 : i32, i32
  }
  func.func @transform_5(%arg0: i32, %arg1: i32) -> (i32, i32) {
    %c0_i32 = arith.constant 0 : i32
    %c0_i32_0 = arith.constant 0 : i32
    %c0_i32_1 = arith.constant 0 : i32
    return %c0_i32, %c0_i32_0 : i32, i32
  }
  func.func @transform_6(%arg0: i32, %arg1: i32) -> (i32, i32, i32) {
    %c0_i32 = arith.constant 0 : i32
    %c0_i32_0 = arith.constant 0 : i32
    return %arg0, %arg1, %c0_i32 : i32, i32, i32
  }
}

</mosaic_0001>

<llo_original>
// kernel: tpu_custom_call.1
$region0: #{tpu_custom_call.1}
  #allocation0 [shape = 'u32[]', space=smem, size = 0x4, offset = 0x4, fixed_abs, tag = 'smem constant byte address 0x4 - core index']
  #allocation1 [shape = 'u32[144,128]{1,0:T(1,128)}', space=vmem, size = 0x12000, scoped, tag = 'internal scratch']
  #allocation2 [shape = 'f32[8,128]{1,0:T(8,128)}', space=vmem, size = 0x1000, scoped, tag = 'scratch operand']
  %s0 = inlined_call_operand.hbm [shape: f32[2,8,128], index: 0, kind: input, shape index: {}]
  %s1 = inlined_call_operand.hbm [shape: f32[2,8,128], index: 1, kind: input, shape index: {}]
  %s2 = inlined_call_operand.vmem [shape: f32[8,8], index: 2, kind: input, shape index: {}]
  %s3 = inlined_call_operand.vmem [shape: f32[8,1], index: 3, kind: input, shape index: {}]
  %s4 = inlined_call_operand.vmem [shape: f32[1,128], index: 4, kind: input, shape index: {}]
  %s5 = inlined_call_operand.vmem [shape: f32[1,128], index: 5, kind: input, shape index: {}]
  %s6 = inlined_call_operand.hbm [shape: f32[2,8,128], index: 6, kind: output, shape index: {}]
  %s7 = sld [smem:[#allocation0]]
  $region69: #{tpu_custom_call.1} parent=0
    _
  %s9 = ssub.s32 1, %s7
  %s10 = scalar_select 0, %s9, %s7
  $region1: #{tpu_custom_call.1} parent=0
    #allocation3 [shape = 'u8[8192]{0}', space=vmem, size = 0x2000, scoped, tag = 'input window, operand 0']
    #allocation4 [shape = 's32[2]{0}', space=sflag, size = 0x8, scoped, tag = 'scoped memory for tpu_custom_call.1']
    #allocation5 [shape = 's32[2]{0}', space=sflag, size = 0x8, scoped, tag = 'scoped memory for tpu_custom_call.1']
    #allocation6 [shape = 'u8[8192]{0}', space=vmem, size = 0x2000, scoped, tag = 'input window, operand 1']
    #allocation7 [shape = 's32[2]{0}', space=sflag, size = 0x8, scoped, tag = 'scoped memory for tpu_custom_call.1']
    #allocation8 [shape = 'u8[8192]{0}', space=vmem, size = 0x2000, scoped, tag = 'output window, operand 0']
    %11 = vsyncpa [#allocation4], 0
    %s12 = scalar_lea.sflag [#allocation4], 1
    %13 = vsyncpa %s12, 0
    %14 = vsyncpa [#allocation7], 0
    %s15 = scalar_lea.sflag [#allocation7], 1
    %16 = vsyncpa %s15, 0
    %17 = vsyncpa [#allocation5], 0
    %s18 = scalar_lea.sflag [#allocation5], 1
    %19 = vsyncpa %s18, 0
    loop: start=0, step=1, limit=4
    $region2: #{tpu_custom_call.1} parent=1 // loop_pre_header
      _
    $region3: #{tpu_custom_call.1} parent=1 // loop_header
      %s21 = sphi 0, %s25
      %p22 = scmp.ge.s32.totalorder %s21, 4
      %s28 = sphi 0, %s40
      %s29 = sphi 0, %s36
      %s30 = sphi 0, %s28
      %s31 = sphi 0, %s29
      %s32 = sphi 0, %s30
      %s33 = sphi 0, %s31
      %s45 = sphi 0, %s47
      %s48 = sphi 0, %s45
      %s49 = sphi 0, %s48
      %s65 = sphi 0, %s49
      %s71 = sphi 0, %s73
      %s74 = sphi 0, %s71
      %s75 = sphi 0, %s74
      %s91 = sphi 0, %s75
      %s97 = sphi 0, %s99
      %s100 = sphi 0, %s97
      %s101 = sphi 0, %s100
      %s117 = sphi 0, %s101
      %s123 = sphi 0, %s125
      %s126 = sphi 0, %s123
      %s127 = sphi 0, %s126
      %s143 = sphi 0, %s127
      %s147 = sphi 0, %s147
      %s149 = sphi 0, %s147
      %s150 = sphi 0, %s149
      %s164 = sphi 0, %s150
      %s168 = sphi 0, %s168
      %s170 = sphi 0, %s168
      %s171 = sphi 0, %s170
      %s185 = sphi 0, %s171
      %s193 = sphi 0, %s195
      %s196 = sphi 0, %s193
      %s197 = sphi 0, %s196
      %s213 = sphi 0, %s197
    $region4: #{tpu_custom_call.1} parent=1 // loop_header_branch
      %24 = sbr.rel (%p22) target = $region8
    $region5: #{tpu_custom_call.1} parent=1 // loop_body
      %s26 = ssub.s32 %s21, 1
      %s27 = ssub.s32 %s21, 2
      %s34 = sadd.s32 1, %s29
      %p35 = scmp.ge.s32.totalorder %s34, 1
      %s36 = scalar_select %p35, 0, %s34
      %s37 = sadd.s32 1, %s28
      %s38 = scalar_select %p35, %s37, %s28
      %p39 = scmp.ge.s32.totalorder %s38, 2
      %s40 = scalar_select %p39, 0, %s38
      %s41 = ssub.s32 %s28, %s40
      %s42 = ssub.s32 %s29, %s36
      %s43 = sor.u32 %s41, %s42
      %p44 = scmp.eq.s32.totalorder %s43, 0
      %s46 = sadd.s32 %s45, 1
      %s47 = scalar_select %p44, %s45, %s46
      %p50 = pneg %p44
      %p51 = scmp.eq.s32.totalorder %s21, 1
      %p52 = por %p50, %p51
      %p53 = scmp.ne.s32.totalorder %s45, %s48
      %p54 = scmp.eq.s32.totalorder %s21, 0
      %p55 = por %p53, %p54
      %p56 = scmp.ne.s32.totalorder %s45, %s48
      %p57 = scmp.eq.s32.totalorder %s26, 1
      %p58 = por %p56, %p57
      %p59 = scmp.ne.s32.totalorder %s48, %s49
      %p60 = scmp.eq.s32.totalorder %s26, 0
      %p61 = por %p59, %p60
      %p62 = scmp.ne.s32.totalorder %s48, %s49
      %p63 = scmp.eq.s32.totalorder %s27, 1
      %p64 = por %p62, %p63
      %p66 = scmp.ne.s32.totalorder %s49, %s65
      %p67 = scmp.eq.s32.totalorder %s27, 0
      %p68 = por %p66, %p67
      %s69 = ssub.s32 %s28, %s40
      %p70 = scmp.eq.s32.totalorder %s69, 0
      %s72 = sadd.s32 %s71, 1
      %s73 = scalar_select %p70, %s71, %s72
      %p76 = pneg %p70
      %p77 = scmp.eq.s32.totalorder %s21, 1
      %p78 = por %p76, %p77
      %p79 = scmp.ne.s32.totalorder %s71, %s74
      %p80 = scmp.eq.s32.totalorder %s21, 0
      %p81 = por %p79, %p80
      %p82 = scmp.ne.s32.totalorder %s71, %s74
      %p83 = scmp.eq.s32.totalorder %s26, 1
      %p84 = por %p82, %p83
      %p85 = scmp.ne.s32.totalorder %s74, %s75
      %p86 = scmp.eq.s32.totalorder %s26, 0
      %p87 = por %p85, %p86
      %p88 = scmp.ne.s32.totalorder %s74, %s75
      %p89 = scmp.eq.s32.totalorder %s27, 1
      %p90 = por %p88, %p89
      %p92 = scmp.ne.s32.totalorder %s75, %s91
      %p93 = scmp.eq.s32.totalorder %s27, 0
      %p94 = por %p92, %p93
      %s95 = ssub.s32 %s29, %s36
      %p96 = scmp.eq.s32.totalorder %s95, 0
      %s98 = sadd.s32 %s97, 1
      %s99 = scalar_select %p96, %s97, %s98
      %p102 = pneg %p96
      %p103 = scmp.eq.s32.totalorder %s21, 1
      %p104 = por %p102, %p103
      %p105 = scmp.ne.s32.totalorder %s97, %s100
      %p106 = scmp.eq.s32.totalorder %s21, 0
      %p107 = por %p105, %p106
      %p108 = scmp.ne.s32.totalorder %s97, %s100
      %p109 = scmp.eq.s32.totalorder %s26, 1
      %p110 = por %p108, %p109
      %p111 = scmp.ne.s32.totalorder %s100, %s101
      %p112 = scmp.eq.s32.totalorder %s26, 0
      %p113 = por %p111, %p112
      %p114 = scmp.ne.s32.totalorder %s100, %s101
      %p115 = scmp.eq.s32.totalorder %s27, 1
      %p116 = por %p114, %p115
      %p118 = scmp.ne.s32.totalorder %s101, %s117
      %p119 = scmp.eq.s32.totalorder %s27, 0
      %p120 = por %p118, %p119
      %s121 = ssub.s32 %s29, %s36
      %p122 = scmp.eq.s32.totalorder %s121, 0
      %s124 = sadd.s32 %s123, 1
      %s125 = scalar_select %p122, %s123, %s124
      %p128 = pneg %p122
      %p129 = scmp.eq.s32.totalorder %s21, 1
      %p130 = por %p128, %p129
      %p131 = scmp.ne.s32.totalorder %s123, %s126
      %p132 = scmp.eq.s32.totalorder %s21, 0
      %p133 = por %p131, %p132
      %p134 = scmp.ne.s32.totalorder %s123, %s126
      %p135 = scmp.eq.s32.totalorder %s26, 1
      %p136 = por %p134, %p135
      %p137 = scmp.ne.s32.totalorder %s126, %s127
      %p138 = scmp.eq.s32.totalorder %s26, 0
      %p139 = por %p137, %p138
      %p140 = scmp.ne.s32.totalorder %s126, %s127
      %p141 = scmp.eq.s32.totalorder %s27, 1
      %p142 = por %p140, %p141
      %p144 = scmp.ne.s32.totalorder %s127, %s143
      %p145 = scmp.eq.s32.totalorder %s27, 0
      %p146 = por %p144, %p145
      %s148 = sadd.s32 %s147, 1
      %p151 = scmp.eq.s32.totalorder %s21, 1
      %p152 = scmp.ne.s32.totalorder %s147, %s149
      %p153 = scmp.eq.s32.totalorder %s21, 0
      %p154 = por %p152, %p153
      %p155 = scmp.ne.s32.totalorder %s147, %s149
      %p156 = scmp.eq.s32.totalorder %s26, 1
      %p157 = por %p155, %p156
      %p158 = scmp.ne.s32.totalorder %s149, %s150
      %p159 = scmp.eq.s32.totalorder %s26, 0
      %p160 = por %p158, %p159
      %p161 = scmp.ne.s32.totalorder %s149, %s150
      %p162 = scmp.eq.s32.totalorder %s27, 1
      %p163 = por %p161, %p162
      %p165 = scmp.ne.s32.totalorder %s150, %s164
      %p166 = scmp.eq.s32.totalorder %s27, 0
      %p167 = por %p165, %p166
      %s169 = sadd.s32 %s168, 1
      %p172 = scmp.eq.s32.totalorder %s21, 1
      %p173 = scmp.ne.s32.totalorder %s168, %s170
      %p174 = scmp.eq.s32.totalorder %s21, 0
      %p175 = por %p173, %p174
      %p176 = scmp.ne.s32.totalorder %s168, %s170
      %p177 = scmp.eq.s32.totalorder %s26, 1
      %p178 = por %p176, %p177
      %p179 = scmp.ne.s32.totalorder %s170, %s171
      %p180 = scmp.eq.s32.totalorder %s26, 0
      %p181 = por %p179, %p180
      %p182 = scmp.ne.s32.totalorder %s170, %s171
      %p183 = scmp.eq.s32.totalorder %s27, 1
      %p184 = por %p182, %p183
      %p186 = scmp.ne.s32.totalorder %s171, %s185
      %p187 = scmp.eq.s32.totalorder %s27, 0
      %p188 = por %p186, %p187
      %s189 = ssub.s32 %s28, %s40
      %s190 = ssub.s32 %s29, %s36
      %s191 = sor.u32 %s189, %s190
      %p192 = scmp.eq.s32.totalorder %s191, 0
      %s194 = sadd.s32 %s193, 1
      %s195 = scalar_select %p192, %s193, %s194
      %p198 = pneg %p192
      %p199 = scmp.eq.s32.totalorder %s21, 1
      %p200 = por %p198, %p199
      %p201 = scmp.ne.s32.totalorder %s193, %s196
      %p202 = scmp.eq.s32.totalorder %s21, 0
      %p203 = por %p201, %p202
      %p204 = scmp.ne.s32.totalorder %s193, %s196
      %p205 = scmp.eq.s32.totalorder %s26, 1
      %p206 = por %p204, %p205
      %p207 = scmp.ne.s32.totalorder %s196, %s197
      %p208 = scmp.eq.s32.totalorder %s26, 0
      %p209 = por %p207, %p208
      %p210 = scmp.ne.s32.totalorder %s196, %s197
      %p211 = scmp.eq.s32.totalorder %s27, 1
      %p212 = por %p210, %p211
      %p214 = scmp.ne.s32.totalorder %s197, %s213
      %p215 = scmp.eq.s32.totalorder %s27, 0
      %p216 = por %p214, %p215
      %p217 = scmp.le.s32.totalorder 1, %s21
      %p218 = scmp.lt.s32.totalorder %s21, 3
      %p219 = pnand %p217, %p218
      %p220 = pneg %p219
      // Predicated region
      $region9: #{tpu_custom_call.1} parent=5 // pred_check
        _
      $region10: #{tpu_custom_call.1} parent=5 // pred_check_branch
        %222 = sbr.rel (%p219) target = $region12
      $region11: #{tpu_custom_call.1} parent=5 // pred_region
        %s223 = ssub.s32 %s21, 1
        // Predicated region
        $region13: #{tpu_custom_call.1} parent=11 // pred_check
          %p224 = pneg %p113
        $region14: #{tpu_custom_call.1} parent=11 // pred_check_branch
          %226 = sbr.rel (%p224) target = $region16
        $region15: #{tpu_custom_call.1} parent=11 // pred_region
          %p227 = scmp.lt.s32.totalorder %s31, 0
          %s228 = scalar_select %p227, %s31, 0
          %s229 = smul.addr %s228, 8
          %s230 = scalar_lea.vmem %s2, %s229
        $region16: #{tpu_custom_call.1} parent=11 // pred_fallthru
          _
        // Predicated region
        $region17: #{tpu_custom_call.1} parent=11 // pred_check
          %p231 = pneg %p139
        $region18: #{tpu_custom_call.1} parent=11 // pred_check_branch
          %233 = sbr.rel (%p231) target = $region20
        $region19: #{tpu_custom_call.1} parent=11 // pred_region
          %p234 = scmp.lt.s32.totalorder %s31, 0
          %s235 = scalar_select %p234, %s31, 0
          %s236 = smul.addr %s235, 8
          %s237 = scalar_lea.vmem %s3, %s236
        $region20: #{tpu_custom_call.1} parent=11 // pred_fallthru
          _
        // Predicated region
        $region21: #{tpu_custom_call.1} parent=11 // pred_check
          %p238 = pneg %p160
        $region22: #{tpu_custom_call.1} parent=11 // pred_check_branch
          %240 = sbr.rel (%p238) target = $region24
        $region23: #{tpu_custom_call.1} parent=11 // pred_region
          _
        $region24: #{tpu_custom_call.1} parent=11 // pred_fallthru
          _
        // Predicated region
        $region25: #{tpu_custom_call.1} parent=11 // pred_check
          %p241 = pneg %p181
        $region26: #{tpu_custom_call.1} parent=11 // pred_check_branch
          %243 = sbr.rel (%p241) target = $region28
        $region27: #{tpu_custom_call.1} parent=11 // pred_region
          _
        $region28: #{tpu_custom_call.1} parent=11 // pred_fallthru
          _
      $region12: #{tpu_custom_call.1} parent=5 // pred_fallthru
        _
      %p244 = scmp.lt.s32.totalorder %s21, 2
      // Predicated region
      $region29: #{tpu_custom_call.1} parent=5 // pred_check
        %p245 = pneg %p244
      $region30: #{tpu_custom_call.1} parent=5 // pred_check_branch
        %247 = sbr.rel (%p245) target = $region32
      $region31: #{tpu_custom_call.1} parent=5 // pred_region
        // Predicated region
        $region33: #{tpu_custom_call.1} parent=31 // pred_check
          %p248 = pneg %p55
        $region34: #{tpu_custom_call.1} parent=31 // pred_check_branch
          %250 = sbr.rel (%p248) target = $region36
        $region35: #{tpu_custom_call.1} parent=31 // pred_region
          %s251 = sand.u32 %s45, 1
          %s252 = scalar_lea.sflag [#allocation4], %s251
          %s253 = sand.u32 %s45, 1
          %s254 = smul.addr %s253, 8
          %s255 = scalar_lea.vmem [#allocation3], %s254
          %s257 = ssub.s32 128, 128
          %258 = vsyncadd %s252, %s257
          %s259 = sadd.s32 %s29, %s28
          %s260 = smul.addr %s259, 128
          %s261 = scalar_lea.hbm %s0, %s260
          %s263 = sshll.u32 %s255, 4
          %s264 = int_to_ptr.vmem [resolvable:$true] %s263
          %266 = dma.hbm_to_vmem [thread:$0]  %s261, 128, %s264, %s252
        $region36: #{tpu_custom_call.1} parent=31 // pred_fallthru
          _
        // Predicated region
        $region37: #{tpu_custom_call.1} parent=31 // pred_check
          %p267 = pneg %p81
        $region38: #{tpu_custom_call.1} parent=31 // pred_check_branch
          %269 = sbr.rel (%p267) target = $region40
        $region39: #{tpu_custom_call.1} parent=31 // pred_region
          %s270 = sand.u32 %s71, 1
          %s271 = scalar_lea.sflag [#allocation7], %s270
          %s272 = sand.u32 %s71, 1
          %s273 = smul.addr %s272, 8
          %s274 = scalar_lea.vmem [#allocation6], %s273
          %s276 = ssub.s32 128, 128
          %277 = vsyncadd %s271, %s276
          %s278 = smul.addr %s28, 128
          %s279 = scalar_lea.hbm %s1, %s278
          %s281 = sshll.u32 %s274, 4
          %s282 = int_to_ptr.vmem [resolvable:$true] %s281
          %284 = dma.hbm_to_vmem [thread:$0]  %s279, 128, %s282, %s271
        $region40: #{tpu_custom_call.1} parent=31 // pred_fallthru
          _
      $region32: #{tpu_custom_call.1} parent=5 // pred_fallthru
        _
      %p285 = scmp.le.s32.totalorder 1, %s21
      %p286 = scmp.lt.s32.totalorder %s21, 3
      %p287 = pnand %p285, %p286
      %p288 = pneg %p287
      // Predicated region
      $region41: #{tpu_custom_call.1} parent=5 // pred_check
        _
      $region42: #{tpu_custom_call.1} parent=5 // pred_check_branch
        %290 = sbr.rel (%p287) target = $region44
      $region43: #{tpu_custom_call.1} parent=5 // pred_region
        %s291 = ssub.s32 %s21, 1
        %s292 = sand.u32 %s48, 1
        %s293 = scalar_lea.sflag [#allocation4], %s292
        %s294 = sand.u32 %s48, 1
        %s295 = smul.addr %s294, 8
        %s296 = scalar_lea.vmem [#allocation3], %s295
        // Predicated region
        $region45: #{tpu_custom_call.1} parent=43 // pred_check
          %p297 = pneg %p61
        $region46: #{tpu_custom_call.1} parent=43 // pred_check_branch
          %299 = sbr.rel (%p297) target = $region48
        $region47: #{tpu_custom_call.1} parent=43 // pred_region
          %300 = dma.done %s293, 128
        $region48: #{tpu_custom_call.1} parent=43 // pred_fallthru
          _
        %s301 = sand.u32 %s74, 1
        %s302 = scalar_lea.sflag [#allocation7], %s301
        %s303 = sand.u32 %s74, 1
        %s304 = smul.addr %s303, 8
        %s305 = scalar_lea.vmem [#allocation6], %s304
        // Predicated region
        $region49: #{tpu_custom_call.1} parent=43 // pred_check
          %p306 = pneg %p87
        $region50: #{tpu_custom_call.1} parent=43 // pred_check_branch
          %308 = sbr.rel (%p306) target = $region52
        $region51: #{tpu_custom_call.1} parent=43 // pred_region
          %309 = dma.done %s302, 128
        $region52: #{tpu_custom_call.1} parent=43 // pred_fallthru
          _
        %s310 = sand.u32 %s48, 1
        %s311 = scalar_lea.sflag [#allocation4], %s310
        %s312 = sand.u32 %s48, 1
        %s313 = smul.addr %s312, 8
        %s314 = scalar_lea.vmem [#allocation3], %s313
        %p315 = pneg %p61
        %p316 = pneg %p58
        %s317 = sand.u32 %s74, 1
        %s318 = scalar_lea.sflag [#allocation7], %s317
        %s319 = sand.u32 %s74, 1
        %s320 = smul.addr %s319, 8
        %s321 = scalar_lea.vmem [#allocation6], %s320
        %p322 = pneg %p87
        %p323 = pneg %p84
        %p324 = scmp.lt.s32.totalorder %s31, 0
        %s325 = scalar_select %p324, %s31, 0
        %s326 = smul.addr %s325, 8
        %s327 = scalar_lea.vmem %s2, %s326
        %p328 = pneg %p113
        %p329 = pneg %p110
        %p330 = scmp.lt.s32.totalorder %s31, 0
        %s331 = scalar_select %p330, %s31, 0
        %s332 = smul.addr %s331, 8
        %s333 = scalar_lea.vmem %s3, %s332
        %p334 = pneg %p139
        %p335 = pneg %p136
        %p336 = pneg %p160
        %p337 = pneg %p157
        %p338 = pneg %p181
        %p339 = pneg %p178
        %p340 = pneg %p209
        %p341 = pneg %p206
        %s342 = sand.u32 %s196, 1
        %s343 = scalar_lea.sflag [#allocation5], %s342
        %s344 = sand.u32 %s196, 1
        %s345 = smul.addr %s344, 8
        %s346 = scalar_lea.vmem [#allocation8], %s345
        %p347 = scmp.lt.s32.totalorder %s31, 0
        %s348 = scalar_select %p347, %s31, 0
        %s349 = smul.addr %s348, 8
        %s350 = scalar_lea.vmem %s2, %s349
        %p351 = scmp.lt.s32.totalorder %s31, 0
        %s352 = scalar_select %p351, %s31, 0
        %s353 = smul.addr %s352, 8
        %s354 = scalar_lea.vmem %s3, %s353
        %p355 = scmp.eq.s32.totalorder %s31, 0
        // Predicated region
        $region53: #{tpu_custom_call.1} parent=43 // pred_check
          %p356 = pneg %p355
        $region54: #{tpu_custom_call.1} parent=43 // pred_check_branch
          %358 = sbr.rel (%p356) target = $region56
        $region55: #{tpu_custom_call.1} parent=43 // pred_region
          %v359 = vld [vmem:[%s305] sm:$0xff]
          %360 = vadd.xlane.f32.xlu0 %v359
          %v361 = vpop.xlane.xlu0 %360
          %v362 = vmul.f32 %v359, %v359
          %363 = vadd.xlane.f32.xlu0 %v362
          %v364 = vpop.xlane.xlu0 %363
          %v365 = vmul.f32 %v361, 0.03125
          %v366 = vmul.f32 %v364, 0.03125
          %v367 = vmul.f32 %v365, %v365
          %v368 = vsub.f32 %v366, %v367
          %v369 = vmax.f32 %v368, 0.0
          %v370 = vadd.f32 %v369, 1e-05
          %v371 = vrsqrt.pop %v370
          %v372 = vsub.f32 %v359, %v365
          %v373 = vmul.f32 %v372, %v371
          %v374 = vld [vmem:[%s4] sm:$0x1]
          %v376 = vlaneseq
          %v377 = vshrl.u32 %v376, 7
          %v378 = vsub.s32 0, %v377
          %v379 = vrot.slane %v374, %v378
          %v381 = vmul.f32 %v373, %v379
          %v382 = vld [vmem:[%s5] sm:$0x1]
          %v384 = vlaneseq
          %v385 = vshrl.u32 %v384, 7
          %v386 = vsub.s32 0, %v385
          %v387 = vrot.slane %v382, %v386
          %v389 = vadd.f32 %v381, %v387
          %390 = vst [vmem:[#allocation2] sm:$0xff] %v389
        $region56: #{tpu_custom_call.1} parent=43 // pred_fallthru
          _
        %v391 = vld [vmem:[%s350] sm:$0xff]
        %v392 = vld [vmem:[#allocation2] sm:$0xff]
        %v393 = vld [vmem:[%s354] sm:$0xff]
        %395 = vset.pattern.permute.xlu0 0
        %396 = vperm.xlu0 %395, %v393
        %v397 = vpop.permute.xlu0 %396
        %vm399 = vcmask 64512
        %v401 = vsel %vm399, %v391, 0
        %403 = vmatprep.subr.mxu0 0.0
        %404 = vmatpush1.msra.mxu0 %v392
        %405 = vmatprep.subr.mxu0 0.0
        %406 = vmatpush1.msra.mxu0 0.0
        %407 = vmatprep.subr.mxu0 0.0
        %408 = vmatpush1.msra.mxu0 0.0
        %409 = vmatprep.subr.mxu0 0.0
        %410 = vmatpush1.msra.mxu0 0.0
        %411 = vmatprep.subr.mxu0 0.0
        %412 = vmatpush1.msra.mxu0 0.0
        %413 = vmatprep.subr.mxu0 0.0
        %414 = vmatpush1.msra.mxu0 0.0
        %415 = vmatprep.subr.mxu0 0.0
        %416 = vmatpush1.msra.mxu0 0.0
        %417 = vmatprep.subr.mxu0 0.0
        %418 = vmatpush1.msra.mxu0 0.0
        %419 = vmatprep.subr.mxu0 0.0
        %420 = vmatpush1.msra.mxu0 0.0
        %421 = vmatprep.subr.mxu0 0.0
        %422 = vmatpush1.msra.mxu0 0.0
        %423 = vmatprep.subr.mxu0 0.0
        %424 = vmatpush1.msra.mxu0 0.0
        %425 = vmatprep.subr.mxu0 0.0
        %426 = vmatpush1.msra.mxu0 0.0
        %427 = vmatprep.subr.mxu0 0.0
        %428 = vmatpush1.msra.mxu0 0.0
        %429 = vmatprep.subr.mxu0 0.0
        %430 = vmatpush1.msra.mxu0 0.0
        %431 = vmatprep.subr.mxu0 0.0
        %432 = vmatpush1.msra.mxu0 0.0
        %433 = vmatprep.subr.mxu0 0.0
        %434 = vmatpush1.msra.mxu0 0.0
        %435 = vmatprep.subr.mxu0 0.0
        %436 = vmatpush1.msra.mxu0 0.0
        %437 = vmatprep.subr.mxu0 0.0
        %438 = vmatpush1.msra.mxu0 0.0
        %439 = vmatprep.subr.mxu0 0.0
        %440 = vmatpush1.msra.mxu0 0.0
        %441 = vmatprep.subr.mxu0 0.0
        %442 = vmatpush1.msra.mxu0 0.0
        %443 = vmatprep.subr.mxu0 0.0
        %444 = vmatpush1.msra.mxu0 0.0
        %445 = vmatprep.subr.mxu0 0.0
        %446 = vmatpush1.msra.mxu0 0.0
        %447 = vmatprep.subr.mxu0 0.0
        %448 = vmatpush1.msra.mxu0 0.0
        %449 = vmatprep.subr.mxu0 0.0
        %450 = vmatpush1.msra.mxu0 0.0
        %451 = vmatprep.subr.mxu0 0.0
        %452 = vmatpush1.msra.mxu0 0.0
        %453 = vmatprep.subr.mxu0 0.0
        %454 = vmatpush1.msra.mxu0 0.0
        %455 = vmatprep.subr.mxu0 0.0
        %456 = vmatpush1.msra.mxu0 0.0
        %457 = vmatprep.subr.mxu0 0.0
        %458 = vmatpush1.msra.mxu0 0.0
        %459 = vmatprep.subr.mxu0 0.0
        %460 = vmatpush1.msra.mxu0 0.0
        %461 = vmatprep.subr.mxu0 0.0
        %462 = vmatpush1.msra.mxu0 0.0
        %463 = vmatprep.subr.mxu0 0.0
        %464 = vmatpush1.msra.mxu0 0.0
        %465 = vmatprep.subr.mxu0 0.0
        %466 = vmatpush1.msra.mxu0 0.0
        %467 = vmatprep.mubr.f32.mxu0 0.0
        %468 = vmatmul.mubr.f32.gmra.mrb[0].mxu0 %v401
        %v469 = vpop.f32.mrb[0].mxu0
        %v470 = vadd.f32 %v397, %v469
        %v471 = vpop.f32.mrb[0].mxu0
        %472 = vdwg.mxu0
        %v473 = vld [vmem:[%s296] sm:$0xff]
        %v474 = vmul.f32 %v473, %v470
        %475 = vst [vmem:[%s346] sm:$0xff] %v474
        %s476 = sand.u32 %s196, 1
        %s477 = scalar_lea.sflag [#allocation5], %s476
        %s478 = sand.u32 %s196, 1
        %s479 = smul.addr %s478, 8
        %s480 = scalar_lea.vmem [#allocation8], %s479
        // Predicated region
        $region57: #{tpu_custom_call.1} parent=43 // pred_check
          %p481 = pneg %p206
        $region58: #{tpu_custom_call.1} parent=43 // pred_check_branch
          %483 = sbr.rel (%p481) target = $region60
        $region59: #{tpu_custom_call.1} parent=43 // pred_region
          %s485 = ssub.s32 128, 128
          %486 = vsyncadd %s477, %s485
          %s487 = sadd.s32 %s31, %s30
          %s488 = smul.addr %s487, 128
          %s489 = scalar_lea.hbm %s6, %s488
          %s491 = sshll.u32 %s480, 4
          %s492 = int_to_ptr.vmem [resolvable:$true] %s491
          %494 = dma.vmem_to_hbm [thread:$0]  %s492, 128, %s489, %s477
        $region60: #{tpu_custom_call.1} parent=43 // pred_fallthru
          _
      $region44: #{tpu_custom_call.1} parent=5 // pred_fallthru
        _
      %p495 = scmp.le.s32.totalorder 2, %s21
      // Predicated region
      $region61: #{tpu_custom_call.1} parent=5 // pred_check
        %p496 = pneg %p495
      $region62: #{tpu_custom_call.1} parent=5 // pred_check_branch
        %498 = sbr.rel (%p496) target = $region64
      $region63: #{tpu_custom_call.1} parent=5 // pred_region
        %s499 = ssub.s32 %s21, 2
        // Predicated region
        $region65: #{tpu_custom_call.1} parent=63 // pred_check
          %p500 = pneg %p212
        $region66: #{tpu_custom_call.1} parent=63 // pred_check_branch
          %502 = sbr.rel (%p500) target = $region68
        $region67: #{tpu_custom_call.1} parent=63 // pred_region
          %s503 = sand.u32 %s197, 1
          %s504 = scalar_lea.sflag [#allocation5], %s503
          %s505 = sand.u32 %s197, 1
          %s506 = smul.addr %s505, 8
          %s507 = scalar_lea.vmem [#allocation8], %s506
          %508 = dma.done %s504, 128
        $region68: #{tpu_custom_call.1} parent=63 // pred_fallthru
          _
      $region64: #{tpu_custom_call.1} parent=5 // pred_fallthru
        _
    $region6: #{tpu_custom_call.1} parent=1 // loop_footer
      %s25 = sadd.s32 1, %s21
    $region7: #{tpu_custom_call.1} parent=1 // loop_footer_branch
      %20 = sbr.rel target = $region3
    $region8: #{tpu_custom_call.1} parent=1 // loop_exit
      _
    %509 = vsyncpa [#allocation4], 1
    %s510 = scalar_lea.sflag [#allocation4], 1
    %511 = vsyncpa %s510, 1
    %512 = vsyncpa [#allocation7], 1
    %s513 = scalar_lea.sflag [#allocation7], 1
    %514 = vsyncpa %s513, 1
    %515 = vsyncpa [#allocation5], 1
    %s516 = scalar_lea.sflag [#allocation5], 1
    %517 = vsyncpa %s516, 1

</llo_original>
